<compile_context>
chip_gen: v5e
topology: v5e:2x2
jax: 0.10.0
libtpu: 0.0.40
codegen_flags: <defaults>
</compile_context>

<pallas_src>
import jax
import jax.numpy as jnp
from jax import lax
from jax.experimental import pallas as pl
from jax.experimental.pallas import tpu as pltpu

HIDDEN_SIZE = 32
NUM_GRU_LAYERS = 1
H_PAD = 128  # lane-dense width for the final-hidden output slab


def gru_classifier_kernel(data_ref, wih_ref, bx_ref, whh_ref, bhn_ref,
                          wfc_ref, bfc_ref, logits_ref, hfinal_ref, xp_scr):
    """Single-layer GRU over time + mean over time + relu + linear.

    data_ref : (T, Bb, E)   T-major batch-block of the input sequence
    wih_ref  : (E, 3H)      [W_ir^T | W_iz^T | W_in^T]   (MXU operand dtype)
    bx_ref   : (1, 3H)      [b_ir+b_hr | b_iz+b_hz | b_in]   (f32)
    whh_ref  : (H, 3H)      [W_hr^T | W_hz^T | W_hn^T]   (MXU operand dtype)
    bhn_ref  : (1, H)       b_hn                          (f32)
    wfc_ref  : (H, Cpad)    fc weight, transposed, lane-padded
    bfc_ref  : (1, Cpad)    fc bias, lane-padded          (f32)
    outputs  : logits (Bb, Cpad) f32, final hidden (Bb, H_PAD) f32
    xp_scr   : (T, Bb, 3H)  f32 VMEM scratch for the precomputed projections
    """
    T, Bb, E = data_ref.shape
    H = whh_ref.shape[0]
    H3 = 3 * H

    # ---- One big input projection for ALL timesteps (off the serial path).
    # Foldable biases are already inside bx_ref.  Result goes to a T-major
    # VMEM scratch so each step is a contiguous sublane-aligned load.
    x_flat = data_ref[...].reshape(T * Bb, E)
    xp = jnp.dot(x_flat, wih_ref[...], preferred_element_type=jnp.float32)
    xp_scr[...] = (xp + bx_ref[...]).reshape(T, Bb, H3)

    whh = whh_ref[...]                                  # fused recurrent weight

    # Two independent batch half-chains (when the block allows it) so the
    # scheduler can overlap one chain's gate math with the other's matmul.
    n_chains = 2 if (Bb >= 16 and Bb % 16 == 0) else 1
    rows = Bb // n_chains
    b_hn = jnp.broadcast_to(bhn_ref[...], (rows, H))    # hoisted out of the loop

    hs = [jnp.zeros((rows, H), jnp.float32) for _ in range(n_chains)]
    hsum = [jnp.zeros((rows, H), jnp.float32) for _ in range(n_chains)]

    # ---- Serial recurrence: one fused MXU matmul + VPU/EUP gate math per
    # step per chain, statically unrolled (T is static and small).
    for t in range(T):
        xp_t = xp_scr[t]                                # (Bb, 3H) contiguous load
        for c in range(n_chains):
            xc = xp_t[c * rows:(c + 1) * rows, :]       # static, sublane-aligned
            hh = jnp.dot(hs[c].astype(whh.dtype), whh,
                         preferred_element_type=jnp.float32)   # (rows, 3H)
            # Fused r/z sigmoid over the first 2H lanes (one EUP pass).
            rz = jax.nn.sigmoid(xc[:, :2 * H] + hh[:, :2 * H])
            r = rz[:, :H]
            z = rz[:, H:2 * H]
            n = jnp.tanh(xc[:, 2 * H:] + r * (hh[:, 2 * H:] + b_hn))
            hs[c] = (1.0 - z) * n + z * hs[c]           # PyTorch GRU update
            hsum[c] = hsum[c] + hs[c]

    h = hs[0] if n_chains == 1 else jnp.concatenate(hs, axis=0)
    h_sum = hsum[0] if n_chains == 1 else jnp.concatenate(hsum, axis=0)

    # ---- Epilogue: mean over time (multiply by 1/T), relu, fully-connected.
    inv_t = jnp.float32(1.0 / max(T, 1))
    act = jnp.maximum(h_sum * inv_t, 0.0)
    logits = (jnp.dot(act.astype(wfc_ref.dtype), wfc_ref[...],
                      preferred_element_type=jnp.float32) + bfc_ref[...])
    logits_ref[...] = logits.astype(logits_ref.dtype)

    # Lane-dense final-hidden store (pad H -> H_PAD lanes; unmasked vst).
    Hp = hfinal_ref.shape[1]
    if Hp > H:
        h = jnp.concatenate([h, jnp.zeros((Bb, Hp - H), jnp.float32)], axis=1)
    hfinal_ref[...] = h.astype(hfinal_ref.dtype)


def init_params(key, embed_dim, num_classes, hidden=HIDDEN_SIZE):
    """Deterministic init matching the PyTorch module's parameter shapes
    (uniform(-1/sqrt(H), 1/sqrt(H)), same as torch.nn.GRU / Linear default)."""
    k = 1.0 / jnp.sqrt(jnp.float32(hidden))
    keys = jax.random.split(key, 14)
    u = lambda kk, shape: jax.random.uniform(kk, shape, jnp.float32, -k, k)
    return {
        "w_ir": u(keys[0], (hidden, embed_dim)),
        "w_iz": u(keys[1], (hidden, embed_dim)),
        "w_in": u(keys[2], (hidden, embed_dim)),
        "w_hr": u(keys[3], (hidden, hidden)),
        "w_hz": u(keys[4], (hidden, hidden)),
        "w_hn": u(keys[5], (hidden, hidden)),
        "b_ir": u(keys[6], (hidden,)),
        "b_iz": u(keys[7], (hidden,)),
        "b_in": u(keys[8], (hidden,)),
        "b_hr": u(keys[9], (hidden,)),
        "b_hz": u(keys[10], (hidden,)),
        "b_hn": u(keys[11], (hidden,)),
        "w_fc": u(keys[12], (num_classes, hidden)),
        "b_fc": u(keys[13], (num_classes,)),
    }


def pack_params(params, dtype=jnp.float32):
    """Pack / transpose weights ONCE (outside the per-call forward).

    dtype controls the MXU operand storage (use jnp.bfloat16 on v6e/v7x);
    biases stay f32 since they are added to f32 accumulations and all gate
    math is f32 (also safe on v5e, which has no bf16 VPU/EUP).
    """
    H = params["w_hr"].shape[0]
    C = params["w_fc"].shape[0]
    w_ih = jnp.concatenate(
        [params["w_ir"].T, params["w_iz"].T, params["w_in"].T], axis=1).astype(dtype)
    w_hh = jnp.concatenate(
        [params["w_hr"].T, params["w_hz"].T, params["w_hn"].T], axis=1).astype(dtype)
    # r/z gates only ever need (b_i* + b_h*); fold those sums (and b_in) into
    # the precomputed input projection. Only b_hn stays separate (sits inside
    # the r * (...) term).
    b_x = jnp.concatenate([params["b_ir"] + params["b_hr"],
                           params["b_iz"] + params["b_hz"],
                           params["b_in"]]).astype(jnp.float32)[None, :]
    b_hn = params["b_hn"].astype(jnp.float32)[None, :]
    # Lane-dense logits store: pad the class dim to a full 128-lane slab.
    C_pad = max(128, ((C + 127) // 128) * 128)
    w_fc = jnp.zeros((H, C_pad), dtype).at[:, :C].set(params["w_fc"].T.astype(dtype))
    b_fc = jnp.zeros((1, C_pad), jnp.float32).at[0, :C].set(params["b_fc"])
    return {"w_ih": w_ih, "b_x": b_x, "w_hh": w_hh, "b_hn": b_hn,
            "w_fc": w_fc, "b_fc": b_fc, "num_classes": C}


def classifier_forward(data, h, packed):
    """Mirrors Classifier.forward(data, h).

    Like the PyTorch module, the incoming `h` is ignored (the GRU is called
    without it, so it starts from zeros); returns (logits (B, C),
    final hidden (NUM_GRU_LAYERS, B, HIDDEN_SIZE)).
    """
    del h  # unused, exactly as in the reference forward()
    B, T, E = data.shape
    H = packed["w_hh"].shape[0]
    C = packed["num_classes"]
    C_pad = packed["w_fc"].shape[1]
    dtype = packed["w_ih"].dtype

    # Batch tiling: pad to >= 8 sublanes; once B_pad >= 16 pick a block that
    # (a) yields >= 2 grid blocks so both v7x TensorCores get work,
    # (b) is a multiple of 16 so the kernel can split two half-chains,
    # (c) is capped at 256 (<= MXU M width on v6e/v7x, VMEM is not a limit).
    b8 = ((B + 7) // 8) * 8
    if b8 < 16:
        block_b = b8
    else:
        half = -(-b8 // 2)                       # ceil(b8 / 2)
        block_b = min(256, ((half + 15) // 16) * 16)
    B_pad = ((b8 + block_b - 1) // block_b) * block_b

    # Pad (cheap lax.pad, no full zero-materialize + scatter) and go T-major
    # once in the wrapper so the kernel reads contiguous per-step slabs.
    data_p = jnp.pad(data.astype(dtype), ((0, B_pad - B), (0, 0), (0, 0)))
    data_p = jnp.transpose(data_p, (1, 0, 2))    # (T, B_pad, E)

    grid = (B_pad // block_b,)
    logits_p, h_final_p = pl.pallas_call(
        gru_classifier_kernel,
        out_shape=(jax.ShapeDtypeStruct((B_pad, C_pad), jnp.float32),
                   jax.ShapeDtypeStruct((B_pad, H_PAD), jnp.float32)),
        grid=grid,
        in_specs=[
            pl.BlockSpec((T, block_b, E), lambda i: (0, i, 0)),   # data (T-major, batch-tiled)
            pl.BlockSpec((E, 3 * H), lambda i: (0, 0)),           # w_ih packed
            pl.BlockSpec((1, 3 * H), lambda i: (0, 0)),           # folded input bias
            pl.BlockSpec((H, 3 * H), lambda i: (0, 0)),           # w_hh packed
            pl.BlockSpec((1, H), lambda i: (0, 0)),               # b_hn
            pl.BlockSpec((H, C_pad), lambda i: (0, 0)),           # fc weight (padded)
            pl.BlockSpec((1, C_pad), lambda i: (0, 0)),           # fc bias (padded)
        ],
        out_specs=(pl.BlockSpec((block_b, C_pad), lambda i: (i, 0)),
                   pl.BlockSpec((block_b, H_PAD), lambda i: (i, 0))),
        scratch_shapes=[pltpu.VMEM((T, block_b, 3 * H), jnp.float32)],
        compiler_params=pltpu.CompilerParams(
            dimension_semantics=("parallel",),      # megacore sharding on v7x
            vmem_limit_bytes=32 * 1024 * 1024),
    )(data_p, packed["w_ih"], packed["b_x"], packed["w_hh"], packed["b_hn"],
      packed["w_fc"], packed["b_fc"])

    return logits_p[:B, :C], h_final_p[:B, :H][None, :, :]


def classifier_forward_ref(data, params):
    """Pure-JAX reference of the PyTorch forward, for correctness check."""
    B, T, E = data.shape

    def cell(h, x_t):
        r = jax.nn.sigmoid(x_t @ params["w_ir"].T + params["b_ir"]
                           + h @ params["w_hr"].T + params["b_hr"])
        z = jax.nn.sigmoid(x_t @ params["w_iz"].T + params["b_iz"]
                           + h @ params["w_hz"].T + params["b_hz"])
        n = jnp.tanh(x_t @ params["w_in"].T + params["b_in"]
                     + r * (h @ params["w_hn"].T + params["b_hn"]))
        h_new = (1.0 - z) * n + z * h
        return h_new, h_new

    h0 = jnp.zeros((B, HIDDEN_SIZE), jnp.float32)
    h_last, outs = lax.scan(cell, h0, jnp.transpose(data, (1, 0, 2)))
    res = jnp.maximum(jnp.mean(outs, axis=0), 0.0)
    logits = res @ params["w_fc"].T + params["b_fc"]
    return logits, h_last[None]


if __name__ == "__main__":
    B, T, E, C = 2, 8, 16, 8  # batch, seq-len, embed_dim, num_classes

    key = jax.random.PRNGKey(0)
    k_data, k_params, k_data2 = jax.random.split(key, 3)
    data = jax.random.normal(k_data, (B, T, E), jnp.float32)
    h0 = jnp.zeros((NUM_GRU_LAYERS, B, HIDDEN_SIZE), jnp.float32)  # get_initial_hidden()
    params = init_params(k_params, E, C)
    ref_logits, ref_h = classifier_forward_ref(data, params)

    # --- f32 storage path (default). Not 1e-5 because MXU f32 matmuls may use
    # reduced-precision pass decomposition at DEFAULT precision depending on
    # TPU generation.
    packed_f32 = pack_params(params, dtype=jnp.float32)
    logits, h_out = classifier_forward(data, h0, packed_f32)
    jax.block_until_ready((logits, h_out))
    assert logits.shape == (B, C) and h_out.shape == (NUM_GRU_LAYERS, B, HIDDEN_SIZE)
    assert jnp.allclose(logits, ref_logits, atol=5e-3, rtol=5e-3)
    assert jnp.allclose(h_out, ref_h, atol=5e-3, rtol=5e-3)

    # --- Larger batch: exercises the multi-block "parallel" grid and the
    # two-half-chain interleaved recurrence path.
    B2 = 40
    data2 = jax.random.normal(k_data2, (B2, T, E), jnp.float32)
    h0_2 = jnp.zeros((NUM_GRU_LAYERS, B2, HIDDEN_SIZE), jnp.float32)
    ref_logits2, ref_h2 = classifier_forward_ref(data2, params)
    logits2, h_out2 = classifier_forward(data2, h0_2, packed_f32)
    jax.block_until_ready((logits2, h_out2))
    assert logits2.shape == (B2, C) and h_out2.shape == (NUM_GRU_LAYERS, B2, HIDDEN_SIZE)
    assert jnp.allclose(logits2, ref_logits2, atol=5e-3, rtol=5e-3)
    assert jnp.allclose(h_out2, ref_h2, atol=5e-3, rtol=5e-3)

    # --- bf16 storage / MXU-operand path (v6e/v7x fast path; f32 accumulate
    # and f32 elementwise gate math, so it is also v5e-safe). Looser tolerance
    # because the input data block is also stored bf16 on this path.
    packed_bf16 = pack_params(params, dtype=jnp.bfloat16)
    logits_bf, h_bf = classifier_forward(data, h0, packed_bf16)
    jax.block_until_ready((logits_bf, h_bf))
    assert jnp.allclose(logits_bf, ref_logits, atol=5e-2, rtol=5e-2)
    assert jnp.allclose(h_bf, ref_h, atol=5e-2, rtol=5e-2)

    print("KERNEL_OK")
</pallas_src>

<mosaic_0001>
module attributes {stable_mosaic.version = 11 : i64} {
  func.func @gru_classifier_kernel(%arg0: i32, %arg1: memref<8x8x16xf32, #tpu.memory_space<vmem>>, %arg2: memref<16x96xf32, #tpu.memory_space<vmem>>, %arg3: memref<1x96xf32, #tpu.memory_space<vmem>>, %arg4: memref<32x96xf32, #tpu.memory_space<vmem>>, %arg5: memref<1x32xf32, #tpu.memory_space<vmem>>, %arg6: memref<32x128xf32, #tpu.memory_space<vmem>>, %arg7: memref<1x128xf32, #tpu.memory_space<vmem>>, %arg8: memref<8x128xf32, #tpu.memory_space<vmem>>, %arg9: memref<8x128xf32, #tpu.memory_space<vmem>>, %arg10: memref<8x8x96xf32, #tpu.memory_space<vmem>>) attributes {dimension_semantics = [#tpu.dimension_semantics<parallel>], iteration_bounds = array<i64: 1>, scalar_prefetch = 0 : i64, scratch_operands = 1 : i64, tpu.core_type = #tpu.core_type<tc>, window_params = [{transform_indices = @transform_0, window_bounds = array<i64: 8, 8, 16>}, {pipeline_mode = #tpu.pipeline_mode<synchronous>, transform_indices = @transform_1, window_bounds = array<i64: 16, 96>}, {pipeline_mode = #tpu.pipeline_mode<synchronous>, transform_indices = @transform_2, window_bounds = array<i64: 1, 96>}, {pipeline_mode = #tpu.pipeline_mode<synchronous>, transform_indices = @transform_3, window_bounds = array<i64: 32, 96>}, {pipeline_mode = #tpu.pipeline_mode<synchronous>, transform_indices = @transform_4, window_bounds = array<i64: 1, 32>}, {pipeline_mode = #tpu.pipeline_mode<synchronous>, transform_indices = @transform_5, window_bounds = array<i64: 32, 128>}, {pipeline_mode = #tpu.pipeline_mode<synchronous>, transform_indices = @transform_6, window_bounds = array<i64: 1, 128>}, {transform_indices = @transform_7, window_bounds = array<i64: 8, 128>}, {transform_indices = @transform_8, window_bounds = array<i64: 8, 128>}]} {
    %c0 = arith.constant 0 : index
    %c0_0 = arith.constant 0 : index
    %c0_1 = arith.constant 0 : index
    %0 = vector.load %arg1[%c0, %c0_0, %c0_1] : memref<8x8x16xf32, #tpu.memory_space<vmem>>, vector<8x8x16xf32>
    %1 = vector.shape_cast %0 : vector<8x8x16xf32> to vector<64x16xf32>
    %c0_2 = arith.constant 0 : index
    %c0_3 = arith.constant 0 : index
    %2 = vector.load %arg2[%c0_2, %c0_3] : memref<16x96xf32, #tpu.memory_space<vmem>>, vector<16x96xf32>
    %cst = arith.constant dense<0.000000e+00> : vector<64x96xf32>
    %3 = tpu.matmul %1, %2, %cst {dimension_numbers = #tpu.dot_dimension_numbers<[1], [0], [0], [1], [0, 0, 1, 1], [], []>} : vector<64x16xf32>, vector<16x96xf32>, vector<64x96xf32> -> vector<64x96xf32>
    %c0_4 = arith.constant 0 : index
    %c0_5 = arith.constant 0 : index
    %4 = vector.load %arg3[%c0_4, %c0_5] : memref<1x96xf32, #tpu.memory_space<vmem>>, vector<1x96xf32>
    %5 = vector.broadcast %4 : vector<1x96xf32> to vector<64x96xf32>
    %6 = arith.addf %3, %5 : vector<64x96xf32>
    %7 = vector.shape_cast %6 : vector<64x96xf32> to vector<8x8x96xf32>
    %c0_6 = arith.constant 0 : index
    %c0_7 = arith.constant 0 : index
    %c0_8 = arith.constant 0 : index
    %8 = vector.load %arg10[%c0_6, %c0_7, %c0_8] : memref<8x8x96xf32, #tpu.memory_space<vmem>>, vector<8x8x96xf32>
    tpu.vector_store %arg10[%c0_6, %c0_7, %c0_8], %7 {strides = array<i32>} : memref<8x8x96xf32, #tpu.memory_space<vmem>>, vector<8x8x96xf32>,
    %c0_9 = arith.constant 0 : index
    %c0_10 = arith.constant 0 : index
    %9 = vector.load %arg4[%c0_9, %c0_10] : memref<32x96xf32, #tpu.memory_space<vmem>>, vector<32x96xf32>
    %c0_11 = arith.constant 0 : index
    %c0_12 = arith.constant 0 : index
    %10 = vector.load %arg5[%c0_11, %c0_12] : memref<1x32xf32, #tpu.memory_space<vmem>>, vector<1x32xf32>
    %11 = vector.shape_cast %10 : vector<1x32xf32> to vector<1x32xf32>
    %12 = vector.broadcast %11 : vector<1x32xf32> to vector<8x32xf32>
    %cst_13 = arith.constant 0.000000e+00 : f32
    %13 = vector.broadcast %cst_13 : f32 to vector<8x32xf32>
    %cst_14 = arith.constant 0.000000e+00 : f32
    %14 = vector.broadcast %cst_14 : f32 to vector<8x32xf32>
    %c0_15 = arith.constant 0 : index
    %c0_16 = arith.constant 0 : index
    %c0_17 = arith.constant 0 : index
    %15 = vector.load %arg10[%c0_15, %c0_16, %c0_17] : memref<8x8x96xf32, #tpu.memory_space<vmem>>, vector<1x8x96xf32>
    %16 = vector.shape_cast %15 : vector<1x8x96xf32> to vector<8x96xf32>
    %cst_18 = arith.constant dense<0.000000e+00> : vector<8x96xf32>
    %17 = tpu.matmul %13, %9, %cst_18 {dimension_numbers = #tpu.dot_dimension_numbers<[1], [0], [0], [1], [0, 0, 1, 1], [], []>} : vector<8x32xf32>, vector<32x96xf32>, vector<8x96xf32> -> vector<8x96xf32>
    %18 = vector.extract_strided_slice %16 {offsets = [0, 0], sizes = [8, 64], strides = [1, 1]} : vector<8x96xf32> to vector<8x64xf32>
    %19 = vector.extract_strided_slice %17 {offsets = [0, 0], sizes = [8, 64], strides = [1, 1]} : vector<8x96xf32> to vector<8x64xf32>
    %20 = arith.addf %18, %19 : vector<8x64xf32>
    %21 = arith.negf %20 : vector<8x64xf32>
    %22 = math.exp %21 : vector<8x64xf32>
    %cst_19 = arith.constant 1.000000e+00 : f32
    %23 = vector.broadcast %cst_19 : f32 to vector<8x64xf32>
    %24 = arith.addf %23, %22 : vector<8x64xf32>
    %25 = arith.divf %23, %24 : vector<8x64xf32>
    %26 = vector.extract_strided_slice %25 {offsets = [0, 0], sizes = [8, 32], strides = [1, 1]} : vector<8x64xf32> to vector<8x32xf32>
    %27 = vector.extract_strided_slice %25 {offsets = [0, 32], sizes = [8, 32], strides = [1, 1]} : vector<8x64xf32> to vector<8x32xf32>
    %28 = vector.extract_strided_slice %16 {offsets = [0, 64], sizes = [8, 32], strides = [1, 1]} : vector<8x96xf32> to vector<8x32xf32>
    %29 = vector.extract_strided_slice %17 {offsets = [0, 64], sizes = [8, 32], strides = [1, 1]} : vector<8x96xf32> to vector<8x32xf32>
    %30 = arith.addf %29, %12 : vector<8x32xf32>
    %31 = arith.mulf %26, %30 : vector<8x32xf32>
    %32 = arith.addf %28, %31 : vector<8x32xf32>
    %33 = math.tanh %32 : vector<8x32xf32>
    %cst_20 = arith.constant 1.000000e+00 : f32
    %34 = vector.broadcast %cst_20 : f32 to vector<8x32xf32>
    %35 = arith.subf %34, %27 : vector<8x32xf32>
    %36 = arith.mulf %35, %33 : vector<8x32xf32>
    %37 = arith.mulf %27, %13 : vector<8x32xf32>
    %38 = arith.addf %36, %37 : vector<8x32xf32>
    %39 = arith.addf %14, %38 : vector<8x32xf32>
    %c1 = arith.constant 1 : index
    %c0_21 = arith.constant 0 : index
    %c0_22 = arith.constant 0 : index
    %40 = vector.load %arg10[%c1, %c0_21, %c0_22] : memref<8x8x96xf32, #tpu.memory_space<vmem>>, vector<1x8x96xf32>
    %41 = vector.shape_cast %40 : vector<1x8x96xf32> to vector<8x96xf32>
    %cst_23 = arith.constant dense<0.000000e+00> : vector<8x96xf32>
    %42 = tpu.matmul %38, %9, %cst_23 {dimension_numbers = #tpu.dot_dimension_numbers<[1], [0], [0], [1], [0, 0, 1, 1], [], []>} : vector<8x32xf32>, vector<32x96xf32>, vector<8x96xf32> -> vector<8x96xf32>
    %43 = vector.extract_strided_slice %41 {offsets = [0, 0], sizes = [8, 64], strides = [1, 1]} : vector<8x96xf32> to vector<8x64xf32>
    %44 = vector.extract_strided_slice %42 {offsets = [0, 0], sizes = [8, 64], strides = [1, 1]} : vector<8x96xf32> to vector<8x64xf32>
    %45 = arith.addf %43, %44 : vector<8x64xf32>
    %46 = arith.negf %45 : vector<8x64xf32>
    %47 = math.exp %46 : vector<8x64xf32>
    %cst_24 = arith.constant 1.000000e+00 : f32
    %48 = vector.broadcast %cst_24 : f32 to vector<8x64xf32>
    %49 = arith.addf %48, %47 : vector<8x64xf32>
    %50 = arith.divf %48, %49 : vector<8x64xf32>
    %51 = vector.extract_strided_slice %50 {offsets = [0, 0], sizes = [8, 32], strides = [1, 1]} : vector<8x64xf32> to vector<8x32xf32>
    %52 = vector.extract_strided_slice %50 {offsets = [0, 32], sizes = [8, 32], strides = [1, 1]} : vector<8x64xf32> to vector<8x32xf32>
    %53 = vector.extract_strided_slice %41 {offsets = [0, 64], sizes = [8, 32], strides = [1, 1]} : vector<8x96xf32> to vector<8x32xf32>
    %54 = vector.extract_strided_slice %42 {offsets = [0, 64], sizes = [8, 32], strides = [1, 1]} : vector<8x96xf32> to vector<8x32xf32>
    %55 = arith.addf %54, %12 : vector<8x32xf32>
    %56 = arith.mulf %51, %55 : vector<8x32xf32>
    %57 = arith.addf %53, %56 : vector<8x32xf32>
    %58 = math.tanh %57 : vector<8x32xf32>
    %cst_25 = arith.constant 1.000000e+00 : f32
    %59 = vector.broadcast %cst_25 : f32 to vector<8x32xf32>
    %60 = arith.subf %59, %52 : vector<8x32xf32>
    %61 = arith.mulf %60, %58 : vector<8x32xf32>
    %62 = arith.mulf %52, %38 : vector<8x32xf32>
    %63 = arith.addf %61, %62 : vector<8x32xf32>
    %64 = arith.addf %39, %63 : vector<8x32xf32>
    %c2 = arith.constant 2 : index
    %c0_26 = arith.constant 0 : index
    %c0_27 = arith.constant 0 : index
    %65 = vector.load %arg10[%c2, %c0_26, %c0_27] : memref<8x8x96xf32, #tpu.memory_space<vmem>>, vector<1x8x96xf32>
    %66 = vector.shape_cast %65 : vector<1x8x96xf32> to vector<8x96xf32>
    %cst_28 = arith.constant dense<0.000000e+00> : vector<8x96xf32>
    %67 = tpu.matmul %63, %9, %cst_28 {dimension_numbers = #tpu.dot_dimension_numbers<[1], [0], [0], [1], [0, 0, 1, 1], [], []>} : vector<8x32xf32>, vector<32x96xf32>, vector<8x96xf32> -> vector<8x96xf32>
    %68 = vector.extract_strided_slice %66 {offsets = [0, 0], sizes = [8, 64], strides = [1, 1]} : vector<8x96xf32> to vector<8x64xf32>
    %69 = vector.extract_strided_slice %67 {offsets = [0, 0], sizes = [8, 64], strides = [1, 1]} : vector<8x96xf32> to vector<8x64xf32>
    %70 = arith.addf %68, %69 : vector<8x64xf32>
    %71 = arith.negf %70 : vector<8x64xf32>
    %72 = math.exp %71 : vector<8x64xf32>
    %cst_29 = arith.constant 1.000000e+00 : f32
    %73 = vector.broadcast %cst_29 : f32 to vector<8x64xf32>
    %74 = arith.addf %73, %72 : vector<8x64xf32>
    %75 = arith.divf %73, %74 : vector<8x64xf32>
    %76 = vector.extract_strided_slice %75 {offsets = [0, 0], sizes = [8, 32], strides = [1, 1]} : vector<8x64xf32> to vector<8x32xf32>
    %77 = vector.extract_strided_slice %75 {offsets = [0, 32], sizes = [8, 32], strides = [1, 1]} : vector<8x64xf32> to vector<8x32xf32>
    %78 = vector.extract_strided_slice %66 {offsets = [0, 64], sizes = [8, 32], strides = [1, 1]} : vector<8x96xf32> to vector<8x32xf32>
    %79 = vector.extract_strided_slice %67 {offsets = [0, 64], sizes = [8, 32], strides = [1, 1]} : vector<8x96xf32> to vector<8x32xf32>
    %80 = arith.addf %79, %12 : vector<8x32xf32>
    %81 = arith.mulf %76, %80 : vector<8x32xf32>
    %82 = arith.addf %78, %81 : vector<8x32xf32>
    %83 = math.tanh %82 : vector<8x32xf32>
    %cst_30 = arith.constant 1.000000e+00 : f32
    %84 = vector.broadcast %cst_30 : f32 to vector<8x32xf32>
    %85 = arith.subf %84, %77 : vector<8x32xf32>
    %86 = arith.mulf %85, %83 : vector<8x32xf32>
    %87 = arith.mulf %77, %63 : vector<8x32xf32>
    %88 = arith.addf %86, %87 : vector<8x32xf32>
    %89 = arith.addf %64, %88 : vector<8x32xf32>
    %c3 = arith.constant 3 : index
    %c0_31 = arith.constant 0 : index
    %c0_32 = arith.constant 0 : index
    %90 = vector.load %arg10[%c3, %c0_31, %c0_32] : memref<8x8x96xf32, #tpu.memory_space<vmem>>, vector<1x8x96xf32>
    %91 = vector.shape_cast %90 : vector<1x8x96xf32> to vector<8x96xf32>
    %cst_33 = arith.constant dense<0.000000e+00> : vector<8x96xf32>
    %92 = tpu.matmul %88, %9, %cst_33 {dimension_numbers = #tpu.dot_dimension_numbers<[1], [0], [0], [1], [0, 0, 1, 1], [], []>} : vector<8x32xf32>, vector<32x96xf32>, vector<8x96xf32> -> vector<8x96xf32>
    %93 = vector.extract_strided_slice %91 {offsets = [0, 0], sizes = [8, 64], strides = [1, 1]} : vector<8x96xf32> to vector<8x64xf32>
    %94 = vector.extract_strided_slice %92 {offsets = [0, 0], sizes = [8, 64], strides = [1, 1]} : vector<8x96xf32> to vector<8x64xf32>
    %95 = arith.addf %93, %94 : vector<8x64xf32>
    %96 = arith.negf %95 : vector<8x64xf32>
    %97 = math.exp %96 : vector<8x64xf32>
    %cst_34 = arith.constant 1.000000e+00 : f32
    %98 = vector.broadcast %cst_34 : f32 to vector<8x64xf32>
    %99 = arith.addf %98, %97 : vector<8x64xf32>
    %100 = arith.divf %98, %99 : vector<8x64xf32>
    %101 = vector.extract_strided_slice %100 {offsets = [0, 0], sizes = [8, 32], strides = [1, 1]} : vector<8x64xf32> to vector<8x32xf32>
    %102 = vector.extract_strided_slice %100 {offsets = [0, 32], sizes = [8, 32], strides = [1, 1]} : vector<8x64xf32> to vector<8x32xf32>
    %103 = vector.extract_strided_slice %91 {offsets = [0, 64], sizes = [8, 32], strides = [1, 1]} : vector<8x96xf32> to vector<8x32xf32>
    %104 = vector.extract_strided_slice %92 {offsets = [0, 64], sizes = [8, 32], strides = [1, 1]} : vector<8x96xf32> to vector<8x32xf32>
    %105 = arith.addf %104, %12 : vector<8x32xf32>
    %106 = arith.mulf %101, %105 : vector<8x32xf32>
    %107 = arith.addf %103, %106 : vector<8x32xf32>
    %108 = math.tanh %107 : vector<8x32xf32>
    %cst_35 = arith.constant 1.000000e+00 : f32
    %109 = vector.broadcast %cst_35 : f32 to vector<8x32xf32>
    %110 = arith.subf %109, %102 : vector<8x32xf32>
    %111 = arith.mulf %110, %108 : vector<8x32xf32>
    %112 = arith.mulf %102, %88 : vector<8x32xf32>
    %113 = arith.addf %111, %112 : vector<8x32xf32>
    %114 = arith.addf %89, %113 : vector<8x32xf32>
    %c4 = arith.constant 4 : index
    %c0_36 = arith.constant 0 : index
    %c0_37 = arith.constant 0 : index
    %115 = vector.load %arg10[%c4, %c0_36, %c0_37] : memref<8x8x96xf32, #tpu.memory_space<vmem>>, vector<1x8x96xf32>
    %116 = vector.shape_cast %115 : vector<1x8x96xf32> to vector<8x96xf32>
    %cst_38 = arith.constant dense<0.000000e+00> : vector<8x96xf32>
    %117 = tpu.matmul %113, %9, %cst_38 {dimension_numbers = #tpu.dot_dimension_numbers<[1], [0], [0], [1], [0, 0, 1, 1], [], []>} : vector<8x32xf32>, vector<32x96xf32>, vector<8x96xf32> -> vector<8x96xf32>
    %118 = vector.extract_strided_slice %116 {offsets = [0, 0], sizes = [8, 64], strides = [1, 1]} : vector<8x96xf32> to vector<8x64xf32>
    %119 = vector.extract_strided_slice %117 {offsets = [0, 0], sizes = [8, 64], strides = [1, 1]} : vector<8x96xf32> to vector<8x64xf32>
    %120 = arith.addf %118, %119 : vector<8x64xf32>
    %121 = arith.negf %120 : vector<8x64xf32>
    %122 = math.exp %121 : vector<8x64xf32>
    %cst_39 = arith.constant 1.000000e+00 : f32
    %123 = vector.broadcast %cst_39 : f32 to vector<8x64xf32>
    %124 = arith.addf %123, %122 : vector<8x64xf32>
    %125 = arith.divf %123, %124 : vector<8x64xf32>
    %126 = vector.extract_strided_slice %125 {offsets = [0, 0], sizes = [8, 32], strides = [1, 1]} : vector<8x64xf32> to vector<8x32xf32>
    %127 = vector.extract_strided_slice %125 {offsets = [0, 32], sizes = [8, 32], strides = [1, 1]} : vector<8x64xf32> to vector<8x32xf32>
    %128 = vector.extract_strided_slice %116 {offsets = [0, 64], sizes = [8, 32], strides = [1, 1]} : vector<8x96xf32> to vector<8x32xf32>
    %129 = vector.extract_strided_slice %117 {offsets = [0, 64], sizes = [8, 32], strides = [1, 1]} : vector<8x96xf32> to vector<8x32xf32>
    %130 = arith.addf %129, %12 : vector<8x32xf32>
    %131 = arith.mulf %126, %130 : vector<8x32xf32>
    %132 = arith.addf %128, %131 : vector<8x32xf32>
    %133 = math.tanh %132 : vector<8x32xf32>
    %cst_40 = arith.constant 1.000000e+00 : f32
    %134 = vector.broadcast %cst_40 : f32 to vector<8x32xf32>
    %135 = arith.subf %134, %127 : vector<8x32xf32>
    %136 = arith.mulf %135, %133 : vector<8x32xf32>
    %137 = arith.mulf %127, %113 : vector<8x32xf32>
    %138 = arith.addf %136, %137 : vector<8x32xf32>
    %139 = arith.addf %114, %138 : vector<8x32xf32>
    %c5 = arith.constant 5 : index
    %c0_41 = arith.constant 0 : index
    %c0_42 = arith.constant 0 : index
    %140 = vector.load %arg10[%c5, %c0_41, %c0_42] : memref<8x8x96xf32, #tpu.memory_space<vmem>>, vector<1x8x96xf32>
    %141 = vector.shape_cast %140 : vector<1x8x96xf32> to vector<8x96xf32>
    %cst_43 = arith.constant dense<0.000000e+00> : vector<8x96xf32>
    %142 = tpu.matmul %138, %9, %cst_43 {dimension_numbers = #tpu.dot_dimension_numbers<[1], [0], [0], [1], [0, 0, 1, 1], [], []>} : vector<8x32xf32>, vector<32x96xf32>, vector<8x96xf32> -> vector<8x96xf32>
    %143 = vector.extract_strided_slice %141 {offsets = [0, 0], sizes = [8, 64], strides = [1, 1]} : vector<8x96xf32> to vector<8x64xf32>
    %144 = vector.extract_strided_slice %142 {offsets = [0, 0], sizes = [8, 64], strides = [1, 1]} : vector<8x96xf32> to vector<8x64xf32>
    %145 = arith.addf %143, %144 : vector<8x64xf32>
    %146 = arith.negf %145 : vector<8x64xf32>
    %147 = math.exp %146 : vector<8x64xf32>
    %cst_44 = arith.constant 1.000000e+00 : f32
    %148 = vector.broadcast %cst_44 : f32 to vector<8x64xf32>
    %149 = arith.addf %148, %147 : vector<8x64xf32>
    %150 = arith.divf %148, %149 : vector<8x64xf32>
    %151 = vector.extract_strided_slice %150 {offsets = [0, 0], sizes = [8, 32], strides = [1, 1]} : vector<8x64xf32> to vector<8x32xf32>
    %152 = vector.extract_strided_slice %150 {offsets = [0, 32], sizes = [8, 32], strides = [1, 1]} : vector<8x64xf32> to vector<8x32xf32>
    %153 = vector.extract_strided_slice %141 {offsets = [0, 64], sizes = [8, 32], strides = [1, 1]} : vector<8x96xf32> to vector<8x32xf32>
    %154 = vector.extract_strided_slice %142 {offsets = [0, 64], sizes = [8, 32], strides = [1, 1]} : vector<8x96xf32> to vector<8x32xf32>
    %155 = arith.addf %154, %12 : vector<8x32xf32>
    %156 = arith.mulf %151, %155 : vector<8x32xf32>
    %157 = arith.addf %153, %156 : vector<8x32xf32>
    %158 = math.tanh %157 : vector<8x32xf32>
    %cst_45 = arith.constant 1.000000e+00 : f32
    %159 = vector.broadcast %cst_45 : f32 to vector<8x32xf32>
    %160 = arith.subf %159, %152 : vector<8x32xf32>
    %161 = arith.mulf %160, %158 : vector<8x32xf32>
    %162 = arith.mulf %152, %138 : vector<8x32xf32>
    %163 = arith.addf %161, %162 : vector<8x32xf32>
    %164 = arith.addf %139, %163 : vector<8x32xf32>
    %c6 = arith.constant 6 : index
    %c0_46 = arith.constant 0 : index
    %c0_47 = arith.constant 0 : index
    %165 = vector.load %arg10[%c6, %c0_46, %c0_47] : memref<8x8x96xf32, #tpu.memory_space<vmem>>, vector<1x8x96xf32>
    %166 = vector.shape_cast %165 : vector<1x8x96xf32> to vector<8x96xf32>
    %cst_48 = arith.constant dense<0.000000e+00> : vector<8x96xf32>
    %167 = tpu.matmul %163, %9, %cst_48 {dimension_numbers = #tpu.dot_dimension_numbers<[1], [0], [0], [1], [0, 0, 1, 1], [], []>} : vector<8x32xf32>, vector<32x96xf32>, vector<8x96xf32> -> vector<8x96xf32>
    %168 = vector.extract_strided_slice %166 {offsets = [0, 0], sizes = [8, 64], strides = [1, 1]} : vector<8x96xf32> to vector<8x64xf32>
    %169 = vector.extract_strided_slice %167 {offsets = [0, 0], sizes = [8, 64], strides = [1, 1]} : vector<8x96xf32> to vector<8x64xf32>
    %170 = arith.addf %168, %169 : vector<8x64xf32>
    %171 = arith.negf %170 : vector<8x64xf32>
    %172 = math.exp %171 : vector<8x64xf32>
    %cst_49 = arith.constant 1.000000e+00 : f32
    %173 = vector.broadcast %cst_49 : f32 to vector<8x64xf32>
    %174 = arith.addf %173, %172 : vector<8x64xf32>
    %175 = arith.divf %173, %174 : vector<8x64xf32>
    %176 = vector.extract_strided_slice %175 {offsets = [0, 0], sizes = [8, 32], strides = [1, 1]} : vector<8x64xf32> to vector<8x32xf32>
    %177 = vector.extract_strided_slice %175 {offsets = [0, 32], sizes = [8, 32], strides = [1, 1]} : vector<8x64xf32> to vector<8x32xf32>
    %178 = vector.extract_strided_slice %166 {offsets = [0, 64], sizes = [8, 32], strides = [1, 1]} : vector<8x96xf32> to vector<8x32xf32>
    %179 = vector.extract_strided_slice %167 {offsets = [0, 64], sizes = [8, 32], strides = [1, 1]} : vector<8x96xf32> to vector<8x32xf32>
    %180 = arith.addf %179, %12 : vector<8x32xf32>
    %181 = arith.mulf %176, %180 : vector<8x32xf32>
    %182 = arith.addf %178, %181 : vector<8x32xf32>
    %183 = math.tanh %182 : vector<8x32xf32>
    %cst_50 = arith.constant 1.000000e+00 : f32
    %184 = vector.broadcast %cst_50 : f32 to vector<8x32xf32>
    %185 = arith.subf %184, %177 : vector<8x32xf32>
    %186 = arith.mulf %185, %183 : vector<8x32xf32>
    %187 = arith.mulf %177, %163 : vector<8x32xf32>
    %188 = arith.addf %186, %187 : vector<8x32xf32>
    %189 = arith.addf %164, %188 : vector<8x32xf32>
    %c7 = arith.constant 7 : index
    %c0_51 = arith.constant 0 : index
    %c0_52 = arith.constant 0 : index
    %190 = vector.load %arg10[%c7, %c0_51, %c0_52] : memref<8x8x96xf32, #tpu.memory_space<vmem>>, vector<1x8x96xf32>
    %191 = vector.shape_cast %190 : vector<1x8x96xf32> to vector<8x96xf32>
    %cst_53 = arith.constant dense<0.000000e+00> : vector<8x96xf32>
    %192 = tpu.matmul %188, %9, %cst_53 {dimension_numbers = #tpu.dot_dimension_numbers<[1], [0], [0], [1], [0, 0, 1, 1], [], []>} : vector<8x32xf32>, vector<32x96xf32>, vector<8x96xf32> -> vector<8x96xf32>
    %193 = vector.extract_strided_slice %191 {offsets = [0, 0], sizes = [8, 64], strides = [1, 1]} : vector<8x96xf32> to vector<8x64xf32>
    %194 = vector.extract_strided_slice %192 {offsets = [0, 0], sizes = [8, 64], strides = [1, 1]} : vector<8x96xf32> to vector<8x64xf32>
    %195 = arith.addf %193, %194 : vector<8x64xf32>
    %196 = arith.negf %195 : vector<8x64xf32>
    %197 = math.exp %196 : vector<8x64xf32>
    %cst_54 = arith.constant 1.000000e+00 : f32
    %198 = vector.broadcast %cst_54 : f32 to vector<8x64xf32>
    %199 = arith.addf %198, %197 : vector<8x64xf32>
    %200 = arith.divf %198, %199 : vector<8x64xf32>
    %201 = vector.extract_strided_slice %200 {offsets = [0, 0], sizes = [8, 32], strides = [1, 1]} : vector<8x64xf32> to vector<8x32xf32>
    %202 = vector.extract_strided_slice %200 {offsets = [0, 32], sizes = [8, 32], strides = [1, 1]} : vector<8x64xf32> to vector<8x32xf32>
    %203 = vector.extract_strided_slice %191 {offsets = [0, 64], sizes = [8, 32], strides = [1, 1]} : vector<8x96xf32> to vector<8x32xf32>
    %204 = vector.extract_strided_slice %192 {offsets = [0, 64], sizes = [8, 32], strides = [1, 1]} : vector<8x96xf32> to vector<8x32xf32>
    %205 = arith.addf %204, %12 : vector<8x32xf32>
    %206 = arith.mulf %201, %205 : vector<8x32xf32>
    %207 = arith.addf %203, %206 : vector<8x32xf32>
    %208 = math.tanh %207 : vector<8x32xf32>
    %cst_55 = arith.constant 1.000000e+00 : f32
    %209 = vector.broadcast %cst_55 : f32 to vector<8x32xf32>
    %210 = arith.subf %209, %202 : vector<8x32xf32>
    %211 = arith.mulf %210, %208 : vector<8x32xf32>
    %212 = arith.mulf %202, %188 : vector<8x32xf32>
    %213 = arith.addf %211, %212 : vector<8x32xf32>
    %214 = arith.addf %189, %213 : vector<8x32xf32>
    %cst_56 = arith.constant 1.250000e-01 : f32
    %215 = vector.broadcast %cst_56 : f32 to vector<8x32xf32>
    %216 = arith.mulf %214, %215 : vector<8x32xf32>
    %cst_57 = arith.constant 0.000000e+00 : f32
    %217 = vector.broadcast %cst_57 : f32 to vector<8x32xf32>
    %218 = arith.maximumf %216, %217 : vector<8x32xf32>
    %c0_58 = arith.constant 0 : index
    %c0_59 = arith.constant 0 : index
    %219 = vector.load %arg6[%c0_58, %c0_59] : memref<32x128xf32, #tpu.memory_space<vmem>>, vector<32x128xf32>
    %cst_60 = arith.constant dense<0.000000e+00> : vector<8x128xf32>
    %220 = tpu.matmul %218, %219, %cst_60 {dimension_numbers = #tpu.dot_dimension_numbers<[1], [0], [0], [1], [0, 0, 1, 1], [], []>} : vector<8x32xf32>, vector<32x128xf32>, vector<8x128xf32> -> vector<8x128xf32>
    %c0_61 = arith.constant 0 : index
    %c0_62 = arith.constant 0 : index
    %221 = vector.load %arg7[%c0_61, %c0_62] : memref<1x128xf32, #tpu.memory_space<vmem>>, vector<1x128xf32>
    %222 = vector.broadcast %221 : vector<1x128xf32> to vector<8x128xf32>
    %223 = arith.addf %220, %222 : vector<8x128xf32>
    %c0_63 = arith.constant 0 : index
    %c0_64 = arith.constant 0 : index
    %224 = vector.load %arg8[%c0_63, %c0_64] : memref<8x128xf32, #tpu.memory_space<vmem>>, vector<8x128xf32>
    tpu.vector_store %arg8[%c0_63, %c0_64], %223 {strides = array<i32>} : memref<8x128xf32, #tpu.memory_space<vmem>>, vector<8x128xf32>,
    %cst_65 = arith.constant 0.000000e+00 : f32
    %225 = vector.broadcast %cst_65 : f32 to vector<8x96xf32>
    %226 = tpu.concatenate %213, %225 in 1 : vector<8x32xf32>, vector<8x96xf32> -> vector<8x128xf32>
    %c0_66 = arith.constant 0 : index
    %c0_67 = arith.constant 0 : index
    %227 = vector.load %arg9[%c0_66, %c0_67] : memref<8x128xf32, #tpu.memory_space<vmem>>, vector<8x128xf32>
    tpu.vector_store %arg9[%c0_66, %c0_67], %226 {strides = array<i32>} : memref<8x128xf32, #tpu.memory_space<vmem>>, vector<8x128xf32>,
    return
  }
  func.func @transform_0(%arg0: i32) -> (i32, i32, i32) {
    %c0_i32 = arith.constant 0 : i32
    %c0_i32_0 = arith.constant 0 : i32
    %c0_i32_1 = arith.constant 0 : i32
    return %c0_i32, %arg0, %c0_i32_0 : i32, i32, i32
  }
  func.func @transform_1(%arg0: i32) -> (i32, i32) {
    %c0_i32 = arith.constant 0 : i32
    %c0_i32_0 = arith.constant 0 : i32
    %c0_i32_1 = arith.constant 0 : i32
    return %c0_i32, %c0_i32_0 : i32, i32
  }
  func.func @transform_2(%arg0: i32) -> (i32, i32) {
    %c0_i32 = arith.constant 0 : i32
    %c0_i32_0 = arith.constant 0 : i32
    %c0_i32_1 = arith.constant 0 : i32
    return %c0_i32, %c0_i32_0 : i32, i32
  }
  func.func @transform_3(%arg0: i32) -> (i32, i32) {
    %c0_i32 = arith.constant 0 : i32
    %c0_i32_0 = arith.constant 0 : i32
    %c0_i32_1 = arith.constant 0 : i32
    return %c0_i32, %c0_i32_0 : i32, i32
  }
  func.func @transform_4(%arg0: i32) -> (i32, i32) {
    %c0_i32 = arith.constant 0 : i32
    %c0_i32_0 = arith.constant 0 : i32
    %c0_i32_1 = arith.constant 0 : i32
    return %c0_i32, %c0_i32_0 : i32, i32
  }
  func.func @transform_5(%arg0: i32) -> (i32, i32) {
    %c0_i32 = arith.constant 0 : i32
    %c0_i32_0 = arith.constant 0 : i32
    %c0_i32_1 = arith.constant 0 : i32
    return %c0_i32, %c0_i32_0 : i32, i32
  }
  func.func @transform_6(%arg0: i32) -> (i32, i32) {
    %c0_i32 = arith.constant 0 : i32
    %c0_i32_0 = arith.constant 0 : i32
    %c0_i32_1 = arith.constant 0 : i32
    return %c0_i32, %c0_i32_0 : i32, i32
  }
  func.func @transform_7(%arg0: i32) -> (i32, i32) {
    %c0_i32 = arith.constant 0 : i32
    %c0_i32_0 = arith.constant 0 : i32
    return %arg0, %c0_i32 : i32, i32
  }
  func.func @transform_8(%arg0: i32) -> (i32, i32) {
    %c0_i32 = arith.constant 0 : i32
    %c0_i32_0 = arith.constant 0 : i32
    return %arg0, %c0_i32 : i32, i32
  }
}

</mosaic_0001>

<llo_original>
// kernel: tpu_custom_call.1
$region0: #{tpu_custom_call.1}
  #allocation0 [shape = 'u32[]', space=smem, size = 0x4, offset = 0x4, fixed_abs, tag = 'smem constant byte address 0x4 - core index']
  #allocation1 [shape = 'u32[72,128]{1,0:T(1,128)}', space=vmem, size = 0x9000, scoped, tag = 'internal scratch']
  #allocation2 [shape = 'f32[8,8,96]{2,1,0:T(8,128)}', space=vmem, size = 0x8000, scoped, tag = 'scratch operand']
  %s0 = inlined_call_operand.hbm [shape: f32[8,8,16], index: 0, kind: input, shape index: {}]
  %s1 = inlined_call_operand.hbm [shape: f32[16,96], index: 1, kind: input, shape index: {}]
  %s2 = inlined_call_operand.vmem [shape: f32[1,96], index: 2, kind: input, shape index: {}]
  %s3 = inlined_call_operand.hbm [shape: f32[32,96], index: 3, kind: input, shape index: {}]
  %s4 = inlined_call_operand.vmem [shape: f32[1,32], index: 4, kind: input, shape index: {}]
  %s5 = inlined_call_operand.hbm [shape: f32[32,128], index: 5, kind: input, shape index: {}]
  %s6 = inlined_call_operand.vmem [shape: f32[1,128], index: 6, kind: input, shape index: {}]
  %s7 = inlined_call_operand.hbm [shape: f32[8,128], index: 7, kind: output, shape index: {0}]
  %s8 = inlined_call_operand.hbm [shape: f32[8,128], index: 8, kind: output, shape index: {1}]
  %9 = xla_tuple %s7, %s8
  %s10 = sld [smem:[#allocation0]]
  $region62: #{tpu_custom_call.1} parent=0
    _
  %s12 = ssub.s32 1, %s10
  %s13 = scalar_select 0, %s12, %s10
  $region1: #{tpu_custom_call.1} parent=0
    #allocation3 [shape = 'u8[32768]{0}', space=vmem, size = 0x8000, scoped, tag = 'input window, operand 0, single buffered']
    #allocation4 [shape = 's32[1]{0}', space=sflag, size = 0x4, scoped, tag = 'scoped memory for tpu_custom_call.1']
    #allocation5 [shape = 's32[1]{0}', space=sflag, size = 0x4, scoped, tag = 'scoped memory for tpu_custom_call.1']
    #allocation6 [shape = 'u8[8192]{0}', space=vmem, size = 0x2000, scoped, tag = 'input window, operand 1, single buffered']
    #allocation7 [shape = 's32[1]{0}', space=sflag, size = 0x4, scoped, tag = 'scoped memory for tpu_custom_call.1']
    #allocation8 [shape = 'u8[16384]{0}', space=vmem, size = 0x4000, scoped, tag = 'input window, operand 3, single buffered']
    #allocation9 [shape = 'u8[16384]{0}', space=vmem, size = 0x4000, scoped, tag = 'input window, operand 5, single buffered']
    #allocation10 [shape = 's32[1]{0}', space=sflag, size = 0x4, scoped, tag = 'scoped memory for tpu_custom_call.1']
    #allocation11 [shape = 'u8[4096]{0}', space=vmem, size = 0x1000, scoped, tag = 'output window, operand 0, single buffered']
    #allocation12 [shape = 'u8[4096]{0}', space=vmem, size = 0x1000, scoped, tag = 'output window, operand 1, single buffered']
    #allocation13 [shape = 's32[1]{0}', space=sflag, size = 0x4, scoped, tag = 'scoped memory for tpu_custom_call.1']
    %14 = vsyncpa [#allocation4], 0
    %15 = vsyncpa [#allocation7], 0
    %16 = vsyncpa [#allocation10], 0
    %17 = vsyncpa [#allocation5], 0
    %18 = vsyncpa [#allocation13], 0
    // Predicated region
    $region2: #{tpu_custom_call.1} parent=1 // pred_check
      _
    $region3: #{tpu_custom_call.1} parent=1 // pred_check_branch
      %20 = sbr.rel (0) target = $region5
    $region4: #{tpu_custom_call.1} parent=1 // pred_region
      %22 = vsyncadd [#allocation4], 0
      %s23 = sshll.u32 %s0, 4
      %s24 = int_to_ptr.hbm [resolvable:$true] %s23
      %s25 = sshll.u32 [#allocation3], 4
      %s26 = int_to_ptr.vmem [resolvable:$true] %s25
      %31 = dma.hbm_to_vmem [thread:$0]  %s24, 1024, %s26, [#allocation4], 128, 128, 8
    $region5: #{tpu_custom_call.1} parent=1 // pred_fallthru
      _
    // Predicated region
    $region6: #{tpu_custom_call.1} parent=1 // pred_check
      _
    $region7: #{tpu_custom_call.1} parent=1 // pred_check_branch
      %33 = sbr.rel (0) target = $region9
    $region8: #{tpu_custom_call.1} parent=1 // pred_region
      %35 = vsyncadd [#allocation7], 0
      %s36 = sshll.u32 %s1, 4
      %s37 = int_to_ptr.hbm [resolvable:$true] %s36
      %s38 = sshll.u32 [#allocation6], 4
      %s39 = int_to_ptr.vmem [resolvable:$true] %s38
      %44 = dma.hbm_to_vmem [thread:$0]  %s37, 256, %s39, [#allocation7], 128, 128, 8
    $region9: #{tpu_custom_call.1} parent=1 // pred_fallthru
      _
    // Predicated region
    $region10: #{tpu_custom_call.1} parent=1 // pred_check
      _
    $region11: #{tpu_custom_call.1} parent=1 // pred_check_branch
      %46 = sbr.rel (0) target = $region13
    $region12: #{tpu_custom_call.1} parent=1 // pred_region
      _
    $region13: #{tpu_custom_call.1} parent=1 // pred_fallthru
      _
    // Predicated region
    $region14: #{tpu_custom_call.1} parent=1 // pred_check
      _
    $region15: #{tpu_custom_call.1} parent=1 // pred_check_branch
      %48 = sbr.rel (0) target = $region17
    $region16: #{tpu_custom_call.1} parent=1 // pred_region
      %50 = vsyncadd [#allocation7], 0
      %s51 = sshll.u32 %s3, 4
      %s52 = int_to_ptr.hbm [resolvable:$true] %s51
      %s53 = sshll.u32 [#allocation8], 4
      %s54 = int_to_ptr.vmem [resolvable:$true] %s53
      %59 = dma.hbm_to_vmem [thread:$0]  %s52, 512, %s54, [#allocation7], 128, 128, 8
    $region17: #{tpu_custom_call.1} parent=1 // pred_fallthru
      _
    // Predicated region
    $region18: #{tpu_custom_call.1} parent=1 // pred_check
      _
    $region19: #{tpu_custom_call.1} parent=1 // pred_check_branch
      %61 = sbr.rel (0) target = $region21
    $region20: #{tpu_custom_call.1} parent=1 // pred_region
      _
    $region21: #{tpu_custom_call.1} parent=1 // pred_fallthru
      _
    // Predicated region
    $region22: #{tpu_custom_call.1} parent=1 // pred_check
      _
    $region23: #{tpu_custom_call.1} parent=1 // pred_check_branch
      %63 = sbr.rel (0) target = $region25
    $region24: #{tpu_custom_call.1} parent=1 // pred_region
      %65 = vsyncadd [#allocation10], 0
      %s66 = sshll.u32 %s5, 4
      %s67 = int_to_ptr.hbm [resolvable:$true] %s66
      %s68 = sshll.u32 [#allocation9], 4
      %s69 = int_to_ptr.vmem [resolvable:$true] %s68
      %74 = dma.hbm_to_vmem [thread:$0]  %s67, 512, %s69, [#allocation10], 128, 128, 8
    $region25: #{tpu_custom_call.1} parent=1 // pred_fallthru
      _
    // Predicated region
    $region26: #{tpu_custom_call.1} parent=1 // pred_check
      _
    $region27: #{tpu_custom_call.1} parent=1 // pred_check_branch
      %76 = sbr.rel (0) target = $region29
    $region28: #{tpu_custom_call.1} parent=1 // pred_region
      _
    $region29: #{tpu_custom_call.1} parent=1 // pred_fallthru
      _
    // Predicated region
    $region30: #{tpu_custom_call.1} parent=1 // pred_check
      _
    $region31: #{tpu_custom_call.1} parent=1 // pred_check_branch
      %78 = sbr.rel (0) target = $region33
    $region32: #{tpu_custom_call.1} parent=1 // pred_region
      %80 = dma.done [#allocation4], 1024
    $region33: #{tpu_custom_call.1} parent=1 // pred_fallthru
      _
    // Predicated region
    $region34: #{tpu_custom_call.1} parent=1 // pred_check
      _
    $region35: #{tpu_custom_call.1} parent=1 // pred_check_branch
      %82 = sbr.rel (0) target = $region37
    $region36: #{tpu_custom_call.1} parent=1 // pred_region
      %84 = dma.done [#allocation7], 256
    $region37: #{tpu_custom_call.1} parent=1 // pred_fallthru
      _
    // Predicated region
    $region38: #{tpu_custom_call.1} parent=1 // pred_check
      _
    $region39: #{tpu_custom_call.1} parent=1 // pred_check_branch
      %86 = sbr.rel (0) target = $region41
    $region40: #{tpu_custom_call.1} parent=1 // pred_region
      %88 = dma.done [#allocation7], 512
    $region41: #{tpu_custom_call.1} parent=1 // pred_fallthru
      _
    // Predicated region
    $region42: #{tpu_custom_call.1} parent=1 // pred_check
      _
    $region43: #{tpu_custom_call.1} parent=1 // pred_check_branch
      %90 = sbr.rel (0) target = $region45
    $region44: #{tpu_custom_call.1} parent=1 // pred_region
      %92 = dma.done [#allocation10], 512
    $region45: #{tpu_custom_call.1} parent=1 // pred_fallthru
      _
    %v93 = vld [vmem:[#allocation3] sm:$0xff]
    %v94 = vld [vmem:[#allocation3 + $0x8] sm:$0xff]
    %v95 = vld [vmem:[#allocation3 + $0x10] sm:$0xff]
    %v96 = vld [vmem:[#allocation3 + $0x18] sm:$0xff]
    %v97 = vld [vmem:[#allocation3 + $0x20] sm:$0xff]
    %v98 = vld [vmem:[#allocation3 + $0x28] sm:$0xff]
    %v99 = vld [vmem:[#allocation3 + $0x30] sm:$0xff]
    %v100 = vld [vmem:[#allocation3 + $0x38] sm:$0xff]
    %v101 = vld [vmem:[#allocation6] sm:$0xff]
    %v102 = vld [vmem:[#allocation6 + $0x8] sm:$0xff]
    %v103 = vld [vmem:[%s2] sm:$0x1]
    %v105 = vperm.slane %v103, 0
    %vm107 = vcmask 130048
    %v109 = vsel %vm107, %v93, 0
    %v112 = vsel %vm107, %v94, 0
    %v115 = vsel %vm107, %v95, 0
    %v118 = vsel %vm107, %v96, 0
    %v121 = vsel %vm107, %v97, 0
    %v124 = vsel %vm107, %v98, 0
    %v127 = vsel %vm107, %v99, 0
    %v130 = vsel %vm107, %v100, 0
    %132 = vmatpush.msra.mxu0 0.0
    %133 = vmatpush.msra.mxu0 0.0
    %134 = vmatpush.msra.mxu0 0.0
    %135 = vmatpush.msra.mxu0 0.0
    %136 = vmatpush.msra.mxu0 0.0
    %137 = vmatpush.msra.mxu0 0.0
    %138 = vmatpush.msra.mxu0 0.0
    %139 = vmatpush.msra.mxu0 0.0
    %140 = vmatpush.msra.mxu0 0.0
    %141 = vmatpush.msra.mxu0 0.0
    %142 = vmatpush.msra.mxu0 0.0
    %143 = vmatpush.msra.mxu0 0.0
    %144 = vmatpush.msra.mxu0 0.0
    %145 = vmatpush.msra.mxu0 0.0
    %146 = vmatpush.msra.mxu0 %v102
    %147 = vmatpush.msra.mxu0 %v101
    %148 = vmatmul.f32.gmra.mxu0 %v109
    %v149 = vpop.f32.mrf.mxu0
    %v150 = vadd.f32 %v105, %v149
    %151 = vmatmul.f32.gmra.mxu0 %v112
    %v152 = vpop.f32.mrf.mxu0
    %v153 = vadd.f32 %v105, %v152
    %154 = vmatmul.f32.gmra.mxu0 %v115
    %v155 = vpop.f32.mrf.mxu0
    %v156 = vadd.f32 %v105, %v155
    %157 = vmatmul.f32.gmra.mxu0 %v118
    %v158 = vpop.f32.mrf.mxu0
    %v159 = vadd.f32 %v105, %v158
    %160 = vmatmul.f32.gmra.mxu0 %v121
    %v161 = vpop.f32.mrf.mxu0
    %v162 = vadd.f32 %v105, %v161
    %163 = vmatmul.f32.gmra.mxu0 %v124
    %v164 = vpop.f32.mrf.mxu0
    %v165 = vadd.f32 %v105, %v164
    %166 = vmatmul.f32.gmra.mxu0 %v127
    %v167 = vpop.f32.mrf.mxu0
    %v168 = vadd.f32 %v105, %v167
    %169 = vmatmul.f32.gmra.mxu0 %v130
    %v170 = vpop.f32.mrf.mxu0
    %v171 = vadd.f32 %v105, %v170
    %172 = vdwg.mxu0
    %vm173 = vcmask 785408
    %174 = vst.msk [vmem:[#allocation2] sm:$0xff] %vm173, %v150
    %175 = vst.msk [vmem:[#allocation2 + $0x8] sm:$0xff] %vm173, %v153
    %176 = vst.msk [vmem:[#allocation2 + $0x10] sm:$0xff] %vm173, %v156
    %177 = vst.msk [vmem:[#allocation2 + $0x18] sm:$0xff] %vm173, %v159
    %178 = vst.msk [vmem:[#allocation2 + $0x20] sm:$0xff] %vm173, %v162
    %179 = vst.msk [vmem:[#allocation2 + $0x28] sm:$0xff] %vm173, %v165
    %180 = vst.msk [vmem:[#allocation2 + $0x30] sm:$0xff] %vm173, %v168
    %181 = vst.msk [vmem:[#allocation2 + $0x38] sm:$0xff] %vm173, %v171
    %v182 = vld [vmem:[#allocation8] sm:$0xff]
    %v183 = vld [vmem:[#allocation8 + $0x8] sm:$0xff]
    %v184 = vld [vmem:[#allocation8 + $0x10] sm:$0xff]
    %v185 = vld [vmem:[#allocation8 + $0x18] sm:$0xff]
    %v186 = vld [vmem:[%s4] sm:$0x1]
    %v188 = vperm.slane %v186, 0
    %v189 = vld [vmem:[#allocation2] sm:$0xff]
    %vm190 = vcmask 261120
    %v192 = vsel %vm190, 0.0, 0
    %194 = vmatpush.msra.mxu0 0.0
    %195 = vmatpush.msra.mxu0 0.0
    %196 = vmatpush.msra.mxu0 0.0
    %197 = vmatpush.msra.mxu0 0.0
    %198 = vmatpush.msra.mxu0 0.0
    %199 = vmatpush.msra.mxu0 0.0
    %200 = vmatpush.msra.mxu0 0.0
    %201 = vmatpush.msra.mxu0 0.0
    %202 = vmatpush.msra.mxu0 0.0
    %203 = vmatpush.msra.mxu0 0.0
    %204 = vmatpush.msra.mxu0 0.0
    %205 = vmatpush.msra.mxu0 0.0
    %206 = vmatpush.msra.mxu0 %v185
    %207 = vmatpush.msra.mxu0 %v184
    %208 = vmatpush.msra.mxu0 %v183
    %209 = vmatpush.msra.mxu0 %v182
    %210 = vmatmul.f32.gmra.mxu0 %v192
    %v211 = vpop.f32.mrf.mxu0
    %v212 = vadd.f32 0.0, %v211
    %213 = vdwg.mxu0
    %v214 = vadd.f32 %v189, %v212
    %v215 = vxor.u32 %v214, 2147483648
    %v216 = vmul.f32 %v215, 1.442695
    %v217 = vpow.pop %v216
    %v218 = vadd.f32 %v217, 1.0
    %v219 = vrcp.pop %v218
    %v220 = vmul.f32 %v218, %v219
    %v221 = vsub.f32 1.0, %v220
    %v222 = vmul.f32 %v219, %v221
    %v223 = vadd.f32 %v219, %v222
    %vm224 = vweird.f32 %v218
    %vm225 = vweird.f32 %v219
    %vm226 = vmor %vm224, %vm225
    %v227 = vsel %vm226, %v219, %v223
    %v228 = vand.u32 2147483647, %v218
    %vm229 = vcmp.eq.f32.partialorder %v228, 8.507059e+37
    %v230 = vand.u32 %v218, 2147483648
    %v231 = vor.u32 1.1754944e-38, %v230
    %v232 = vsel %vm229, %v231, %v227
    %v233 = vmul.f32 1.0, %v232
    %234 = vrot.lane.b32.xlu0 %v188, 64
    %v235 = vpop.permute.xlu0 %234
    %v237 = vadd.f32 %v212, %v235
    %239 = vrot.lane.b32.xlu0 %v237, 64
    %v240 = vpop.permute.xlu0 %239
    %v242 = vmul.f32 %v233, %v240
    %244 = vrot.lane.b32.xlu0 %v242, 64
    %v245 = vpop.permute.xlu0 %244
    %v247 = vadd.f32 %v189, %v245
    %v248 = vtanh.pop %v247
    %v249 = vsub.f32 1.0, %v233
    %251 = vrot.lane.b32.xlu0 %v248, 96
    %v252 = vpop.permute.xlu0 %251
    %v254 = vmul.f32 %v249, %v252
    %v255 = vmul.f32 %v233, 0.0
    %v256 = vadd.f32 %v254, %v255
    %v257 = vadd.f32 %v256, 0.0
    %s258 = scalar_lea.vmem [#allocation2], 8
    %v259 = vld [vmem:[%s258] sm:$0xff]
    %261 = vrot.lane.b32.xlu0 %v256, 96
    %v262 = vpop.permute.xlu0 %261
    %v263 = vsel %vm190, %v262, 0
    %265 = vmatpush.msra.mxu0 0.0
    %266 = vmatpush.msra.mxu0 0.0
    %267 = vmatpush.msra.mxu0 0.0
    %268 = vmatpush.msra.mxu0 0.0
    %269 = vmatpush.msra.mxu0 0.0
    %270 = vmatpush.msra.mxu0 0.0
    %271 = vmatpush.msra.mxu0 0.0
    %272 = vmatpush.msra.mxu0 0.0
    %273 = vmatpush.msra.mxu0 0.0
    %274 = vmatpush.msra.mxu0 0.0
    %275 = vmatpush.msra.mxu0 0.0
    %276 = vmatpush.msra.mxu0 0.0
    %277 = vmatpush.msra.mxu0 %v185
    %278 = vmatpush.msra.mxu0 %v184
    %279 = vmatpush.msra.mxu0 %v183
    %280 = vmatpush.msra.mxu0 %v182
    %281 = vmatmul.f32.gmra.mxu0 %v263
    %v282 = vpop.f32.mrf.mxu0
    %v283 = vadd.f32 0.0, %v282
    %284 = vdwg.mxu0
    %v285 = vadd.f32 %v259, %v283
    %v286 = vxor.u32 %v285, 2147483648
    %v287 = vmul.f32 %v286, 1.442695
    %v288 = vpow.pop %v287
    %v289 = vadd.f32 %v288, 1.0
    %v290 = vrcp.pop %v289
    %v291 = vmul.f32 %v289, %v290
    %v292 = vsub.f32 1.0, %v291
    %v293 = vmul.f32 %v290, %v292
    %v294 = vadd.f32 %v290, %v293
    %vm295 = vweird.f32 %v289
    %vm296 = vweird.f32 %v290
    %vm297 = vmor %vm295, %vm296
    %v298 = vsel %vm297, %v290, %v294
    %v299 = vand.u32 2147483647, %v289
    %vm300 = vcmp.eq.f32.partialorder %v299, 8.507059e+37
    %v301 = vand.u32 %v289, 2147483648
    %v302 = vor.u32 1.1754944e-38, %v301
    %v303 = vsel %vm300, %v302, %v298
    %v304 = vmul.f32 1.0, %v303
    %v305 = vadd.f32 %v283, %v235
    %307 = vrot.lane.b32.xlu0 %v305, 64
    %v308 = vpop.permute.xlu0 %307
    %v310 = vmul.f32 %v304, %v308
    %312 = vrot.lane.b32.xlu0 %v310, 64
    %v313 = vpop.permute.xlu0 %312
    %v315 = vadd.f32 %v259, %v313
    %v316 = vtanh.pop %v315
    %v317 = vsub.f32 1.0, %v304
    %319 = vrot.lane.b32.xlu0 %v316, 96
    %v320 = vpop.permute.xlu0 %319
    %v322 = vmul.f32 %v317, %v320
    %v323 = vmul.f32 %v304, %v256
    %v324 = vadd.f32 %v322, %v323
    %v325 = vadd.f32 %v257, %v324
    %s326 = scalar_lea.vmem [#allocation2], 16
    %v327 = vld [vmem:[%s326] sm:$0xff]
    %329 = vrot.lane.b32.xlu0 %v324, 96
    %v330 = vpop.permute.xlu0 %329
    %v331 = vsel %vm190, %v330, 0
    %333 = vmatpush.msra.mxu0 0.0
    %334 = vmatpush.msra.mxu0 0.0
    %335 = vmatpush.msra.mxu0 0.0
    %336 = vmatpush.msra.mxu0 0.0
    %337 = vmatpush.msra.mxu0 0.0
    %338 = vmatpush.msra.mxu0 0.0
    %339 = vmatpush.msra.mxu0 0.0
    %340 = vmatpush.msra.mxu0 0.0
    %341 = vmatpush.msra.mxu0 0.0
    %342 = vmatpush.msra.mxu0 0.0
    %343 = vmatpush.msra.mxu0 0.0
    %344 = vmatpush.msra.mxu0 0.0
    %345 = vmatpush.msra.mxu0 %v185
    %346 = vmatpush.msra.mxu0 %v184
    %347 = vmatpush.msra.mxu0 %v183
    %348 = vmatpush.msra.mxu0 %v182
    %349 = vmatmul.f32.gmra.mxu0 %v331
    %v350 = vpop.f32.mrf.mxu0
    %v351 = vadd.f32 0.0, %v350
    %352 = vdwg.mxu0
    %v353 = vadd.f32 %v327, %v351
    %v354 = vxor.u32 %v353, 2147483648
    %v355 = vmul.f32 %v354, 1.442695
    %v356 = vpow.pop %v355
    %v357 = vadd.f32 %v356, 1.0
    %v358 = vrcp.pop %v357
    %v359 = vmul.f32 %v357, %v358
    %v360 = vsub.f32 1.0, %v359
    %v361 = vmul.f32 %v358, %v360
    %v362 = vadd.f32 %v358, %v361
    %vm363 = vweird.f32 %v357
    %vm364 = vweird.f32 %v358
    %vm365 = vmor %vm363, %vm364
    %v366 = vsel %vm365, %v358, %v362
    %v367 = vand.u32 2147483647, %v357
    %vm368 = vcmp.eq.f32.partialorder %v367, 8.507059e+37
    %v369 = vand.u32 %v357, 2147483648
    %v370 = vor.u32 1.1754944e-38, %v369
    %v371 = vsel %vm368, %v370, %v366
    %v372 = vmul.f32 1.0, %v371
    %v373 = vadd.f32 %v351, %v235
    %375 = vrot.lane.b32.xlu0 %v373, 64
    %v376 = vpop.permute.xlu0 %375
    %v378 = vmul.f32 %v372, %v376
    %380 = vrot.lane.b32.xlu0 %v378, 64
    %v381 = vpop.permute.xlu0 %380
    %v383 = vadd.f32 %v327, %v381
    %v384 = vtanh.pop %v383
    %v385 = vsub.f32 1.0, %v372
    %387 = vrot.lane.b32.xlu0 %v384, 96
    %v388 = vpop.permute.xlu0 %387
    %v390 = vmul.f32 %v385, %v388
    %v391 = vmul.f32 %v372, %v324
    %v392 = vadd.f32 %v390, %v391
    %v393 = vadd.f32 %v325, %v392
    %s394 = scalar_lea.vmem [#allocation2], 24
    %v395 = vld [vmem:[%s394] sm:$0xff]
    %397 = vrot.lane.b32.xlu0 %v392, 96
    %v398 = vpop.permute.xlu0 %397
    %v399 = vsel %vm190, %v398, 0
    %401 = vmatpush.msra.mxu0 0.0
    %402 = vmatpush.msra.mxu0 0.0
    %403 = vmatpush.msra.mxu0 0.0
    %404 = vmatpush.msra.mxu0 0.0
    %405 = vmatpush.msra.mxu0 0.0
    %406 = vmatpush.msra.mxu0 0.0
    %407 = vmatpush.msra.mxu0 0.0
    %408 = vmatpush.msra.mxu0 0.0
    %409 = vmatpush.msra.mxu0 0.0
    %410 = vmatpush.msra.mxu0 0.0
    %411 = vmatpush.msra.mxu0 0.0
    %412 = vmatpush.msra.mxu0 0.0
    %413 = vmatpush.msra.mxu0 %v185
    %414 = vmatpush.msra.mxu0 %v184
    %415 = vmatpush.msra.mxu0 %v183
    %416 = vmatpush.msra.mxu0 %v182
    %417 = vmatmul.f32.gmra.mxu0 %v399
    %v418 = vpop.f32.mrf.mxu0
    %v419 = vadd.f32 0.0, %v418
    %420 = vdwg.mxu0
    %v421 = vadd.f32 %v395, %v419
    %v422 = vxor.u32 %v421, 2147483648
    %v423 = vmul.f32 %v422, 1.442695
    %v424 = vpow.pop %v423
    %v425 = vadd.f32 %v424, 1.0
    %v426 = vrcp.pop %v425
    %v427 = vmul.f32 %v425, %v426
    %v428 = vsub.f32 1.0, %v427
    %v429 = vmul.f32 %v426, %v428
    %v430 = vadd.f32 %v426, %v429
    %vm431 = vweird.f32 %v425
    %vm432 = vweird.f32 %v426
    %vm433 = vmor %vm431, %vm432
    %v434 = vsel %vm433, %v426, %v430
    %v435 = vand.u32 2147483647, %v425
    %vm436 = vcmp.eq.f32.partialorder %v435, 8.507059e+37
    %v437 = vand.u32 %v425, 2147483648
    %v438 = vor.u32 1.1754944e-38, %v437
    %v439 = vsel %vm436, %v438, %v434
    %v440 = vmul.f32 1.0, %v439
    %v441 = vadd.f32 %v419, %v235
    %443 = vrot.lane.b32.xlu0 %v441, 64
    %v444 = vpop.permute.xlu0 %443
    %v446 = vmul.f32 %v440, %v444
    %448 = vrot.lane.b32.xlu0 %v446, 64
    %v449 = vpop.permute.xlu0 %448
    %v451 = vadd.f32 %v395, %v449
    %v452 = vtanh.pop %v451
    %v453 = vsub.f32 1.0, %v440
    %455 = vrot.lane.b32.xlu0 %v452, 96
    %v456 = vpop.permute.xlu0 %455
    %v458 = vmul.f32 %v453, %v456
    %v459 = vmul.f32 %v440, %v392
    %v460 = vadd.f32 %v458, %v459
    %v461 = vadd.f32 %v393, %v460
    %s462 = scalar_lea.vmem [#allocation2], 32
    %v463 = vld [vmem:[%s462] sm:$0xff]
    %465 = vrot.lane.b32.xlu0 %v460, 96
    %v466 = vpop.permute.xlu0 %465
    %v467 = vsel %vm190, %v466, 0
    %469 = vmatpush.msra.mxu0 0.0
    %470 = vmatpush.msra.mxu0 0.0
    %471 = vmatpush.msra.mxu0 0.0
    %472 = vmatpush.msra.mxu0 0.0
    %473 = vmatpush.msra.mxu0 0.0
    %474 = vmatpush.msra.mxu0 0.0
    %475 = vmatpush.msra.mxu0 0.0
    %476 = vmatpush.msra.mxu0 0.0
    %477 = vmatpush.msra.mxu0 0.0
    %478 = vmatpush.msra.mxu0 0.0
    %479 = vmatpush.msra.mxu0 0.0
    %480 = vmatpush.msra.mxu0 0.0
    %481 = vmatpush.msra.mxu0 %v185
    %482 = vmatpush.msra.mxu0 %v184
    %483 = vmatpush.msra.mxu0 %v183
    %484 = vmatpush.msra.mxu0 %v182
    %485 = vmatmul.f32.gmra.mxu0 %v467
    %v486 = vpop.f32.mrf.mxu0
    %v487 = vadd.f32 0.0, %v486
    %488 = vdwg.mxu0
    %v489 = vadd.f32 %v463, %v487
    %v490 = vxor.u32 %v489, 2147483648
    %v491 = vmul.f32 %v490, 1.442695
    %v492 = vpow.pop %v491
    %v493 = vadd.f32 %v492, 1.0
    %v494 = vrcp.pop %v493
    %v495 = vmul.f32 %v493, %v494
    %v496 = vsub.f32 1.0, %v495
    %v497 = vmul.f32 %v494, %v496
    %v498 = vadd.f32 %v494, %v497
    %vm499 = vweird.f32 %v493
    %vm500 = vweird.f32 %v494
    %vm501 = vmor %vm499, %vm500
    %v502 = vsel %vm501, %v494, %v498
    %v503 = vand.u32 2147483647, %v493
    %vm504 = vcmp.eq.f32.partialorder %v503, 8.507059e+37
    %v505 = vand.u32 %v493, 2147483648
    %v506 = vor.u32 1.1754944e-38, %v505
    %v507 = vsel %vm504, %v506, %v502
    %v508 = vmul.f32 1.0, %v507
    %v509 = vadd.f32 %v487, %v235
    %511 = vrot.lane.b32.xlu0 %v509, 64
    %v512 = vpop.permute.xlu0 %511
    %v514 = vmul.f32 %v508, %v512
    %516 = vrot.lane.b32.xlu0 %v514, 64
    %v517 = vpop.permute.xlu0 %516
    %v519 = vadd.f32 %v463, %v517
    %v520 = vtanh.pop %v519
    %v521 = vsub.f32 1.0, %v508
    %523 = vrot.lane.b32.xlu0 %v520, 96
    %v524 = vpop.permute.xlu0 %523
    %v526 = vmul.f32 %v521, %v524
    %v527 = vmul.f32 %v508, %v460
    %v528 = vadd.f32 %v526, %v527
    %v529 = vadd.f32 %v461, %v528
    %s530 = scalar_lea.vmem [#allocation2], 40
    %v531 = vld [vmem:[%s530] sm:$0xff]
    %533 = vrot.lane.b32.xlu0 %v528, 96
    %v534 = vpop.permute.xlu0 %533
    %v535 = vsel %vm190, %v534, 0
    %537 = vmatpush.msra.mxu0 0.0
    %538 = vmatpush.msra.mxu0 0.0
    %539 = vmatpush.msra.mxu0 0.0
    %540 = vmatpush.msra.mxu0 0.0
    %541 = vmatpush.msra.mxu0 0.0
    %542 = vmatpush.msra.mxu0 0.0
    %543 = vmatpush.msra.mxu0 0.0
    %544 = vmatpush.msra.mxu0 0.0
    %545 = vmatpush.msra.mxu0 0.0
    %546 = vmatpush.msra.mxu0 0.0
    %547 = vmatpush.msra.mxu0 0.0
    %548 = vmatpush.msra.mxu0 0.0
    %549 = vmatpush.msra.mxu0 %v185
    %550 = vmatpush.msra.mxu0 %v184
    %551 = vmatpush.msra.mxu0 %v183
    %552 = vmatpush.msra.mxu0 %v182
    %553 = vmatmul.f32.gmra.mxu0 %v535
    %v554 = vpop.f32.mrf.mxu0
    %v555 = vadd.f32 0.0, %v554
    %556 = vdwg.mxu0
    %v557 = vadd.f32 %v531, %v555
    %v558 = vxor.u32 %v557, 2147483648
    %v559 = vmul.f32 %v558, 1.442695
    %v560 = vpow.pop %v559
    %v561 = vadd.f32 %v560, 1.0
    %v562 = vrcp.pop %v561
    %v563 = vmul.f32 %v561, %v562
    %v564 = vsub.f32 1.0, %v563
    %v565 = vmul.f32 %v562, %v564
    %v566 = vadd.f32 %v562, %v565
    %vm567 = vweird.f32 %v561
    %vm568 = vweird.f32 %v562
    %vm569 = vmor %vm567, %vm568
    %v570 = vsel %vm569, %v562, %v566
    %v571 = vand.u32 2147483647, %v561
    %vm572 = vcmp.eq.f32.partialorder %v571, 8.507059e+37
    %v573 = vand.u32 %v561, 2147483648
    %v574 = vor.u32 1.1754944e-38, %v573
    %v575 = vsel %vm572, %v574, %v570
    %v576 = vmul.f32 1.0, %v575
    %v577 = vadd.f32 %v555, %v235
    %579 = vrot.lane.b32.xlu0 %v577, 64
    %v580 = vpop.permute.xlu0 %579
    %v582 = vmul.f32 %v576, %v580
    %584 = vrot.lane.b32.xlu0 %v582, 64
    %v585 = vpop.permute.xlu0 %584
    %v587 = vadd.f32 %v531, %v585
    %v588 = vtanh.pop %v587
    %v589 = vsub.f32 1.0, %v576
    %591 = vrot.lane.b32.xlu0 %v588, 96
    %v592 = vpop.permute.xlu0 %591
    %v594 = vmul.f32 %v589, %v592
    %v595 = vmul.f32 %v576, %v528
    %v596 = vadd.f32 %v594, %v595
    %v597 = vadd.f32 %v529, %v596
    %s598 = scalar_lea.vmem [#allocation2], 48
    %v599 = vld [vmem:[%s598] sm:$0xff]
    %601 = vrot.lane.b32.xlu0 %v596, 96
    %v602 = vpop.permute.xlu0 %601
    %v603 = vsel %vm190, %v602, 0
    %605 = vmatpush.msra.mxu0 0.0
    %606 = vmatpush.msra.mxu0 0.0
    %607 = vmatpush.msra.mxu0 0.0
    %608 = vmatpush.msra.mxu0 0.0
    %609 = vmatpush.msra.mxu0 0.0
    %610 = vmatpush.msra.mxu0 0.0
    %611 = vmatpush.msra.mxu0 0.0
    %612 = vmatpush.msra.mxu0 0.0
    %613 = vmatpush.msra.mxu0 0.0
    %614 = vmatpush.msra.mxu0 0.0
    %615 = vmatpush.msra.mxu0 0.0
    %616 = vmatpush.msra.mxu0 0.0
    %617 = vmatpush.msra.mxu0 %v185
    %618 = vmatpush.msra.mxu0 %v184
    %619 = vmatpush.msra.mxu0 %v183
    %620 = vmatpush.msra.mxu0 %v182
    %621 = vmatmul.f32.gmra.mxu0 %v603
    %v622 = vpop.f32.mrf.mxu0
    %v623 = vadd.f32 0.0, %v622
    %624 = vdwg.mxu0
    %v625 = vadd.f32 %v599, %v623
    %v626 = vxor.u32 %v625, 2147483648
    %v627 = vmul.f32 %v626, 1.442695
    %v628 = vpow.pop %v627
    %v629 = vadd.f32 %v628, 1.0
    %v630 = vrcp.pop %v629
    %v631 = vmul.f32 %v629, %v630
    %v632 = vsub.f32 1.0, %v631
    %v633 = vmul.f32 %v630, %v632
    %v634 = vadd.f32 %v630, %v633
    %vm635 = vweird.f32 %v629
    %vm636 = vweird.f32 %v630
    %vm637 = vmor %vm635, %vm636
    %v638 = vsel %vm637, %v630, %v634
    %v639 = vand.u32 2147483647, %v629
    %vm640 = vcmp.eq.f32.partialorder %v639, 8.507059e+37
    %v641 = vand.u32 %v629, 2147483648
    %v642 = vor.u32 1.1754944e-38, %v641
    %v643 = vsel %vm640, %v642, %v638
    %v644 = vmul.f32 1.0, %v643
    %v645 = vadd.f32 %v623, %v235
    %647 = vrot.lane.b32.xlu0 %v645, 64
    %v648 = vpop.permute.xlu0 %647
    %v650 = vmul.f32 %v644, %v648
    %652 = vrot.lane.b32.xlu0 %v650, 64
    %v653 = vpop.permute.xlu0 %652
    %v655 = vadd.f32 %v599, %v653
    %v656 = vtanh.pop %v655
    %v657 = vsub.f32 1.0, %v644
    %659 = vrot.lane.b32.xlu0 %v656, 96
    %v660 = vpop.permute.xlu0 %659
    %v662 = vmul.f32 %v657, %v660
    %v663 = vmul.f32 %v644, %v596
    %v664 = vadd.f32 %v662, %v663
    %v665 = vadd.f32 %v597, %v664
    %s666 = scalar_lea.vmem [#allocation2], 56
    %v667 = vld [vmem:[%s666] sm:$0xff]
    %669 = vrot.lane.b32.xlu0 %v664, 96
    %v670 = vpop.permute.xlu0 %669
    %v671 = vsel %vm190, %v670, 0
    %673 = vmatpush.msra.mxu0 0.0
    %674 = vmatpush.msra.mxu0 0.0
    %675 = vmatpush.msra.mxu0 0.0
    %676 = vmatpush.msra.mxu0 0.0
    %677 = vmatpush.msra.mxu0 0.0
    %678 = vmatpush.msra.mxu0 0.0
    %679 = vmatpush.msra.mxu0 0.0
    %680 = vmatpush.msra.mxu0 0.0
    %681 = vmatpush.msra.mxu0 0.0
    %682 = vmatpush.msra.mxu0 0.0
    %683 = vmatpush.msra.mxu0 0.0
    %684 = vmatpush.msra.mxu0 0.0
    %685 = vmatpush.msra.mxu0 %v185
    %686 = vmatpush.msra.mxu0 %v184
    %687 = vmatpush.msra.mxu0 %v183
    %688 = vmatpush.msra.mxu0 %v182
    %689 = vmatmul.f32.gmra.mxu0 %v671
    %v690 = vpop.f32.mrf.mxu0
    %v691 = vadd.f32 0.0, %v690
    %692 = vdwg.mxu0
    %v693 = vadd.f32 %v667, %v691
    %v694 = vxor.u32 %v693, 2147483648
    %v695 = vmul.f32 %v694, 1.442695
    %v696 = vpow.pop %v695
    %v697 = vadd.f32 %v696, 1.0
    %v698 = vrcp.pop %v697
    %v699 = vmul.f32 %v697, %v698
    %v700 = vsub.f32 1.0, %v699
    %v701 = vmul.f32 %v698, %v700
    %v702 = vadd.f32 %v698, %v701
    %vm703 = vweird.f32 %v697
    %vm704 = vweird.f32 %v698
    %vm705 = vmor %vm703, %vm704
    %v706 = vsel %vm705, %v698, %v702
    %v707 = vand.u32 2147483647, %v697
    %vm708 = vcmp.eq.f32.partialorder %v707, 8.507059e+37
    %v709 = vand.u32 %v697, 2147483648
    %v710 = vor.u32 1.1754944e-38, %v709
    %v711 = vsel %vm708, %v710, %v706
    %v712 = vmul.f32 1.0, %v711
    %v713 = vadd.f32 %v691, %v235
    %715 = vrot.lane.b32.xlu0 %v713, 64
    %v716 = vpop.permute.xlu0 %715
    %v718 = vmul.f32 %v712, %v716
    %720 = vrot.lane.b32.xlu0 %v718, 64
    %v721 = vpop.permute.xlu0 %720
    %v723 = vadd.f32 %v667, %v721
    %v724 = vtanh.pop %v723
    %v725 = vsub.f32 1.0, %v712
    %727 = vrot.lane.b32.xlu0 %v724, 96
    %v728 = vpop.permute.xlu0 %727
    %v730 = vmul.f32 %v725, %v728
    %v731 = vmul.f32 %v712, %v664
    %v732 = vadd.f32 %v730, %v731
    %v733 = vadd.f32 %v665, %v732
    %v734 = vmul.f32 %v733, 0.125
    %v735 = vmax.f32 %v734, 0.0
    %v736 = vld [vmem:[#allocation9] sm:$0xff]
    %v737 = vld [vmem:[#allocation9 + $0x8] sm:$0xff]
    %v738 = vld [vmem:[#allocation9 + $0x10] sm:$0xff]
    %v739 = vld [vmem:[#allocation9 + $0x18] sm:$0xff]
    %v740 = vld [vmem:[%s6] sm:$0x1]
    %v742 = vperm.slane %v740, 0
    %745 = vrot.lane.b32.xlu0 %v735, 96
    %v746 = vpop.permute.xlu0 %745
    %v747 = vsel %vm190, %v746, 0
    %749 = vmatpush.msra.mxu0 0.0
    %750 = vmatpush.msra.mxu0 0.0
    %751 = vmatpush.msra.mxu0 0.0
    %752 = vmatpush.msra.mxu0 0.0
    %753 = vmatpush.msra.mxu0 0.0
    %754 = vmatpush.msra.mxu0 0.0
    %755 = vmatpush.msra.mxu0 0.0
    %756 = vmatpush.msra.mxu0 0.0
    %757 = vmatpush.msra.mxu0 0.0
    %758 = vmatpush.msra.mxu0 0.0
    %759 = vmatpush.msra.mxu0 0.0
    %760 = vmatpush.msra.mxu0 0.0
    %761 = vmatpush.msra.mxu0 %v739
    %762 = vmatpush.msra.mxu0 %v738
    %763 = vmatpush.msra.mxu0 %v737
    %764 = vmatpush.msra.mxu0 %v736
    %765 = vmatmul.f32.gmra.mxu0 %v747
    %v766 = vpop.f32.mrf.mxu0
    %v767 = vadd.f32 %v742, %v766
    %768 = vdwg.mxu0
    %769 = vst [vmem:[#allocation11] sm:$0xff] %v767
    %771 = vrot.lane.b32.xlu0 %v732, 96
    %v772 = vpop.permute.xlu0 %771
    %v774 = vsel %vm190, %v772, 0.0
    %775 = vst [vmem:[#allocation12] sm:$0xff] %v774
    // Predicated region
    $region46: #{tpu_custom_call.1} parent=1 // pred_check
      _
    $region47: #{tpu_custom_call.1} parent=1 // pred_check_branch
      %777 = sbr.rel (0) target = $region49
    $region48: #{tpu_custom_call.1} parent=1 // pred_region
      %779 = vsyncadd [#allocation5], 0
      %s781 = sshll.u32 [#allocation11], 4
      %s782 = int_to_ptr.vmem [resolvable:$true] %s781
      %s783 = sshll.u32 %s7, 4
      %s784 = int_to_ptr.hbm [resolvable:$true] %s783
      %786 = dma.vmem_to_hbm [thread:$0]  %s782, 128, %s784, [#allocation5]
    $region49: #{tpu_custom_call.1} parent=1 // pred_fallthru
      _
    // Predicated region
    $region50: #{tpu_custom_call.1} parent=1 // pred_check
      _
    $region51: #{tpu_custom_call.1} parent=1 // pred_check_branch
      %788 = sbr.rel (0) target = $region53
    $region52: #{tpu_custom_call.1} parent=1 // pred_region
      %790 = vsyncadd [#allocation13], 0
      %s792 = sshll.u32 [#allocation12], 4
      %s793 = int_to_ptr.vmem [resolvable:$true] %s792
      %s794 = sshll.u32 %s8, 4
      %s795 = int_to_ptr.hbm [resolvable:$true] %s794
      %797 = dma.vmem_to_hbm [thread:$0]  %s793, 128, %s795, [#allocation13]
    $region53: #{tpu_custom_call.1} parent=1 // pred_fallthru
      _
    // Predicated region
    $region54: #{tpu_custom_call.1} parent=1 // pred_check
      _
    $region55: #{tpu_custom_call.1} parent=1 // pred_check_branch
      %799 = sbr.rel (0) target = $region57
    $region56: #{tpu_custom_call.1} parent=1 // pred_region
      %801 = dma.done [#allocation5], 128
    $region57: #{tpu_custom_call.1} parent=1 // pred_fallthru
      _
    // Predicated region
    $region58: #{tpu_custom_call.1} parent=1 // pred_check
      _
    $region59: #{tpu_custom_call.1} parent=1 // pred_check_branch
      %803 = sbr.rel (0) target = $region61
    $region60: #{tpu_custom_call.1} parent=1 // pred_region
      %805 = dma.done [#allocation13], 128
    $region61: #{tpu_custom_call.1} parent=1 // pred_fallthru
      _
    %806 = vsyncpa [#allocation4], 1
    %807 = vsyncpa [#allocation7], 1
    %808 = vsyncpa [#allocation10], 1
    %809 = vsyncpa [#allocation5], 1
    %810 = vsyncpa [#allocation13], 1

</llo_original>
